<compile_context>
chip_gen: v6e
topology: v6e:2x2x1
jax: 0.10.0
libtpu: 0.0.40
codegen_flags: <defaults>
</compile_context>

<pallas_src>
import math
import functools

import jax
import jax.numpy as jnp
from jax.experimental import pallas as pl
from jax.experimental.pallas import tpu as pltpu


# ----------------------------- projection kernel --------------------------- #
def _linear_kernel(x_ref, w_ref, b_ref, out_ref):
    # x: (1, ts, Din) bf16, w: (Din, Dout) bf16, b: (1, Dout) f32 -> out bf16
    y = jnp.dot(x_ref[0], w_ref[...], preferred_element_type=jnp.float32)
    out_ref[0] = (y + b_ref[0]).astype(out_ref.dtype)


def _linear_bf16(x, w, b, *, ts=None):
    """(B,S,Din) bf16 @ (Din,Dout) bf16 + (1,Dout) f32 -> (B,S,Dout) bf16."""
    B, S, Din = x.shape
    Dout = w.shape[1]
    if ts is None:
        ts = S
        for cand in (256, 128):
            if S >= cand and S % cand == 0:
                ts = cand
                break
    assert S % ts == 0
    return pl.pallas_call(
        _linear_kernel,
        out_shape=jax.ShapeDtypeStruct((B, S, Dout), jnp.bfloat16),
        grid=(B, S // ts),
        in_specs=[
            pl.BlockSpec((1, ts, Din), lambda b, i: (b, i, 0)),
            pl.BlockSpec((Din, Dout), lambda b, i: (0, 0)),
            pl.BlockSpec((1, Dout), lambda b, i: (0, 0)),
        ],
        out_specs=pl.BlockSpec((1, ts, Dout), lambda b, i: (b, i, 0)),
        compiler_params=pltpu.CompilerParams(
            dimension_semantics=("parallel", "parallel")),
    )(x, w, b)


# ----------------------------- attention kernel ---------------------------- #
def _mha_attention_kernel(q_ref, k_ref, v_ref, mask_ref, wo_ref, bo_ref,
                          out_ref, heads_ref, *, num_heads):
    # q_ref: (1, tq, D) bf16 (already scaled by 1/sqrt(d_k)); k/v: (1, Skv, D) bf16
    # mask_ref: (1, tq, Skv) int8; wo: (D, D) bf16; bo: (1, D) f32
    # heads_ref: (tq, D) bf16 VMEM scratch.
    bf16, f32 = jnp.bfloat16, jnp.float32
    D = q_ref.shape[2]
    dk = D // num_heads
    neg = jnp.float32(-1e9)

    # Hoisted mask compare — one (tq, Skv) bool reused by every head.
    attend = mask_ref[0] != 0

    # Static head loop with NO SSA accumulator: each head's temporaries die into
    # the scratch-ref store (lax.fori_loop + pl.ds would be used for large H).
    for h in range(num_heads):
        sl = slice(h * dk, (h + 1) * dk)
        qh = q_ref[0, :, sl]                               # (tq, dk)  bf16
        kh = k_ref[0, :, sl]                               # (Skv, dk) bf16
        # QK^T without materializing kh.T: contract last dims directly.
        s = jax.lax.dot_general(
            qh, kh, dimension_numbers=(((1,), (1,)), ((), ())),
            preferred_element_type=f32)                    # (tq, Skv) f32
        s = jnp.where(attend, s, neg)                      # masked_fill(mask==0, -1e9)
        s = s - jnp.max(s, axis=-1, keepdims=True)
        p = jnp.exp(s)
        # EUP approximate reciprocal instead of a VPU divide.
        p = p * pl.reciprocal(jnp.sum(p, axis=-1, keepdims=True), approx=True)
        head = jnp.dot(p.astype(bf16), v_ref[0, :, sl],
                       preferred_element_type=f32)         # (tq, dk)
        heads_ref[:, sl] = head.astype(bf16)               # concat via lane offset

    # One full-depth (K=D) output projection instead of H shallow K=dk matmuls.
    out = jnp.dot(heads_ref[...], wo_ref[...], preferred_element_type=f32)
    # TODO(synk): nn.Dropout(p=0.1) on the attention weights is eval-mode
    #             identity; the attention matrix (self.attn) is not returned.
    out_ref[0] = out + bo_ref[0]


# ----------------------------- wrapper -------------------------------------- #
def multi_head_attention(query, key, value, mask, params, num_heads, *, tq=None):
    """query/key/value: (B, S, D) f32; mask: (B, Sq, Skv) (1=attend, 0=masked) or None."""
    B, Sq, D = query.shape
    Skv = key.shape[1]
    assert D % num_heads == 0
    dk = D // num_heads
    scale = 1.0 / math.sqrt(dk)
    bf16 = jnp.bfloat16

    # bf16 activations at the pallas_call boundary; fold 1/sqrt(d_k) into Wq/bq.
    wq = (params["wq"] * scale).astype(bf16)
    bq = params["bq"] * scale
    wk = params["wk"].astype(bf16)
    wv = params["wv"].astype(bf16)
    wo = params["wo"].astype(bf16)
    bk, bv, bo = params["bk"], params["bv"], params["bo"]

    # Q/K/V projections run exactly once (not per query tile), bf16 outputs.
    qp = _linear_bf16(query.astype(bf16), wq, bq)
    kp = _linear_bf16(key.astype(bf16), wk, bk)
    vp = _linear_bf16(value.astype(bf16), wv, bv)

    if mask is None:
        mask = jnp.ones((B, Sq, Skv), jnp.float32)
    mask_i8 = (jnp.broadcast_to(mask, (B, Sq, Skv)) != 0).astype(jnp.int8)

    # VMEM budget: query the chip (falls back to the v7x per-TC 64 MiB), keep
    # 25% headroom so the requested limit is always honorable.
    try:
        vmem_cap = int(pltpu.get_tpu_info().vmem_capacity_bytes)
    except Exception:
        vmem_cap = 64 << 20
    budget = int(0.75 * vmem_cap)

    def attn_vmem(t):
        return (2 * t * D * 2                 # bf16 q tile (double-buffered)
                + 2 * 2 * Skv * D * 2         # bf16 k + v (full seq per step)
                + 2 * t * Skv * 1             # int8 mask tile
                + 2 * t * D * 4               # f32 output tile
                + 2 * (D * D * 2 + D * 4)     # bf16 Wo + f32 bo
                + t * D * 2                   # heads scratch
                + 4 * t * Skv * 4)            # f32 score/softmax intermediates

    if tq is None:
        # 256 fills the 256-wide v6e/v7x MXU (128 already saturates v5e's);
        # fall back to 128, then to the full (short) sequence.
        tq = Sq
        for cand in (256, 128):
            if Sq >= cand and Sq % cand == 0 and attn_vmem(cand) <= budget:
                tq = cand
                break
    assert Sq % tq == 0, "query length must be divisible by the query tile"
    nq = Sq // tq
    vmem_limit = int(min(max(2 * attn_vmem(tq), 16 << 20), budget))

    kernel = functools.partial(_mha_attention_kernel, num_heads=num_heads)
    return pl.pallas_call(
        kernel,
        out_shape=jax.ShapeDtypeStruct((B, Sq, D), jnp.float32),
        grid=(B, nq),
        in_specs=[
            pl.BlockSpec((1, tq, D), lambda b, i: (b, i, 0)),     # q (tiled, scaled)
            pl.BlockSpec((1, Skv, D), lambda b, i: (b, 0, 0)),    # k (full seq)
            pl.BlockSpec((1, Skv, D), lambda b, i: (b, 0, 0)),    # v (full seq)
            pl.BlockSpec((1, tq, Skv), lambda b, i: (b, i, 0)),   # mask (int8)
            pl.BlockSpec((D, D), lambda b, i: (0, 0)),            # Wo
            pl.BlockSpec((1, D), lambda b, i: (0, 0)),            # bo
        ],
        out_specs=pl.BlockSpec((1, tq, D), lambda b, i: (b, i, 0)),
        scratch_shapes=[pltpu.VMEM((tq, D), jnp.bfloat16)],
        compiler_params=pltpu.CompilerParams(
            dimension_semantics=("parallel", "parallel"),
            vmem_limit_bytes=vmem_limit),
    )(qp, kp, vp, mask_i8, wo, bo)


# ----------------------------- params & references -------------------------- #
def init_params(key, D):
    keys = jax.random.split(key, 8)

    def lin_w(k, din, dout):
        return jax.random.normal(k, (din, dout), jnp.float32) / math.sqrt(din)

    def lin_b(k, dout):
        return jax.random.normal(k, (1, dout), jnp.float32) * 0.01

    return {
        "wq": lin_w(keys[0], D, D), "bq": lin_b(keys[1], D),
        "wk": lin_w(keys[2], D, D), "bk": lin_b(keys[3], D),
        "wv": lin_w(keys[4], D, D), "bv": lin_b(keys[5], D),
        "wo": lin_w(keys[6], D, D), "bo": lin_b(keys[7], D),
    }


def mha_ref_f32(q, k, v, mask, p, H):
    """Pure-JAX f32 reference mirroring the PyTorch semantics (eval mode)."""
    B, S, D = q.shape
    Skv = k.shape[1]
    dk = D // H
    qq = (q @ p["wq"] + p["bq"][0]).reshape(B, S, H, dk).transpose(0, 2, 1, 3)
    kk = (k @ p["wk"] + p["bk"][0]).reshape(B, Skv, H, dk).transpose(0, 2, 1, 3)
    vv = (v @ p["wv"] + p["bv"][0]).reshape(B, Skv, H, dk).transpose(0, 2, 1, 3)
    s = jnp.einsum("bhqd,bhkd->bhqk", qq, kk) / math.sqrt(dk)
    s = jnp.where(mask[:, None] == 0, -1e9, s)
    w = jax.nn.softmax(s, axis=-1)
    o = jnp.einsum("bhqk,bhkd->bhqd", w, vv).transpose(0, 2, 1, 3).reshape(B, S, D)
    return o @ p["wo"] + p["bo"][0]


def mha_ref_matched(q, k, v, mask, p, H):
    """Reference with the same bf16-operand / f32-accumulate flow as the kernels."""
    bf16, f32 = jnp.bfloat16, jnp.float32
    B, S, D = q.shape
    Skv = k.shape[1]
    dk = D // H
    scale = 1.0 / math.sqrt(dk)

    def lin(x, w, b):
        y = jnp.einsum("bsd,de->bse", x.astype(bf16), w,
                       preferred_element_type=f32) + b[0]
        return y.astype(bf16)

    qp = lin(q, (p["wq"] * scale).astype(bf16), p["bq"] * scale)
    kp = lin(k, p["wk"].astype(bf16), p["bk"])
    vp = lin(v, p["wv"].astype(bf16), p["bv"])
    qh = qp.reshape(B, S, H, dk).transpose(0, 2, 1, 3)
    kh = kp.reshape(B, Skv, H, dk).transpose(0, 2, 1, 3)
    vh = vp.reshape(B, Skv, H, dk).transpose(0, 2, 1, 3)
    s = jnp.einsum("bhqd,bhkd->bhqk", qh, kh, preferred_element_type=f32)
    s = jnp.where(mask[:, None] == 0, jnp.float32(-1e9), s)
    w = jax.nn.softmax(s, axis=-1)
    o = jnp.einsum("bhqk,bhkd->bhqd", w.astype(bf16), vh,
                   preferred_element_type=f32)
    o = o.transpose(0, 2, 1, 3).reshape(B, S, D).astype(bf16)
    return jnp.einsum("bsd,de->bse", o, p["wo"].astype(bf16),
                      preferred_element_type=f32) + p["bo"][0]


# ----------------------------- test ----------------------------------------- #
if __name__ == "__main__":
    B, S, D, H = 2, 8, 32, 4
    key = jax.random.PRNGKey(0)
    kq, kk, kv, kp = jax.random.split(key, 4)

    query = jax.random.normal(kq, (B, S, D), jnp.float32)
    keyx = jax.random.normal(kk, (B, S, D), jnp.float32)
    value = jax.random.normal(kv, (B, S, D), jnp.float32)
    # Causal mask (exercises the masked_fill path), broadcast over batch.
    mask = jnp.broadcast_to(jnp.tril(jnp.ones((S, S), jnp.float32)), (B, S, S))
    params = init_params(kp, D)

    out = multi_head_attention(query, keyx, value, mask, params, H)
    out = jax.block_until_ready(out)
    assert out.shape == (B, S, D)

    # Tight check against a precision-matched reference (same bf16 matmuls).
    ref_m = mha_ref_matched(query, keyx, value, mask, params, H)
    err_m = float(jnp.max(jnp.abs(out - ref_m)))
    assert jnp.allclose(out, ref_m, atol=1e-2, rtol=1e-2), (
        f"mismatch vs precision-matched reference: max abs err {err_m}")

    # Loose sanity check against the full-f32 PyTorch-semantics reference
    # (difference is only bf16 matmul-operand rounding).
    ref_f = mha_ref_f32(query, keyx, value, mask, params, H)
    err_f = float(jnp.max(jnp.abs(out - ref_f)))
    assert jnp.allclose(out, ref_f, atol=0.25, rtol=0.25), (
        f"mismatch vs f32 reference: max abs err {err_f}")

    print("KERNEL_OK")
</pallas_src>

<mosaic_0001>
module attributes {stable_mosaic.version = 11 : i64} {
  func.func @_linear_kernel(%arg0: i32, %arg1: i32, %arg2: memref<1x8x32xbf16, #tpu.memory_space<vmem>>, %arg3: memref<32x32xbf16, #tpu.memory_space<vmem>>, %arg4: memref<1x32xf32, #tpu.memory_space<vmem>>, %arg5: memref<1x8x32xbf16, #tpu.memory_space<vmem>>) attributes {dimension_semantics = [#tpu.dimension_semantics<parallel>, #tpu.dimension_semantics<parallel>], iteration_bounds = array<i64: 2, 1>, scalar_prefetch = 0 : i64, scratch_operands = 0 : i64, tpu.core_type = #tpu.core_type<tc>, window_params = [{transform_indices = @transform_0, window_bounds = array<i64: 1, 8, 32>}, {pipeline_mode = #tpu.pipeline_mode<synchronous>, transform_indices = @transform_1, window_bounds = array<i64: 32, 32>}, {pipeline_mode = #tpu.pipeline_mode<synchronous>, transform_indices = @transform_2, window_bounds = array<i64: 1, 32>}, {transform_indices = @transform_3, window_bounds = array<i64: 1, 8, 32>}]} {
    %c0 = arith.constant 0 : index
    %c0_0 = arith.constant 0 : index
    %c0_1 = arith.constant 0 : index
    %0 = vector.load %arg2[%c0, %c0_0, %c0_1] : memref<1x8x32xbf16, #tpu.memory_space<vmem>>, vector<1x8x32xbf16>
    %1 = vector.shape_cast %0 : vector<1x8x32xbf16> to vector<8x32xbf16>
    %c0_2 = arith.constant 0 : index
    %c0_3 = arith.constant 0 : index
    %2 = vector.load %arg3[%c0_2, %c0_3] : memref<32x32xbf16, #tpu.memory_space<vmem>>, vector<32x32xbf16>
    %cst = arith.constant dense<0.000000e+00> : vector<8x32xf32>
    %3 = tpu.matmul %1, %2, %cst {dimension_numbers = #tpu.dot_dimension_numbers<[1], [0], [0], [1], [0, 0, 1, 1], [], []>} : vector<8x32xbf16>, vector<32x32xbf16>, vector<8x32xf32> -> vector<8x32xf32>
    %c0_4 = arith.constant 0 : index
    %c0_5 = arith.constant 0 : index
    %4 = vector.load %arg4[%c0_4, %c0_5] : memref<1x32xf32, #tpu.memory_space<vmem>>, vector<1x32xf32>
    %5 = vector.shape_cast %4 : vector<1x32xf32> to vector<32xf32>
    %6 = vector.shape_cast %5 : vector<32xf32> to vector<1x32xf32>
    %7 = vector.broadcast %6 : vector<1x32xf32> to vector<8x32xf32>
    %8 = arith.addf %3, %7 : vector<8x32xf32>
    %9 = arith.truncf %8 : vector<8x32xf32> to vector<8x32xbf16>
    %c0_6 = arith.constant 0 : index
    %c0_7 = arith.constant 0 : index
    %c0_8 = arith.constant 0 : index
    %10 = vector.load %arg5[%c0_6, %c0_7, %c0_8] : memref<1x8x32xbf16, #tpu.memory_space<vmem>>, vector<1x8x32xbf16>
    %11 = vector.shape_cast %10 : vector<1x8x32xbf16> to vector<8x32xbf16>
    %12 = vector.shape_cast %9 : vector<8x32xbf16> to vector<1x8x32xbf16>
    tpu.vector_store %arg5[%c0_6, %c0_7, %c0_8], %12 {strides = array<i32>} : memref<1x8x32xbf16, #tpu.memory_space<vmem>>, vector<1x8x32xbf16>,
    return
  }
  func.func @transform_0(%arg0: i32, %arg1: i32) -> (i32, i32, i32) {
    %c0_i32 = arith.constant 0 : i32
    %c0_i32_0 = arith.constant 0 : i32
    return %arg0, %arg1, %c0_i32 : i32, i32, i32
  }
  func.func @transform_1(%arg0: i32, %arg1: i32) -> (i32, i32) {
    %c0_i32 = arith.constant 0 : i32
    %c0_i32_0 = arith.constant 0 : i32
    %c0_i32_1 = arith.constant 0 : i32
    return %c0_i32, %c0_i32_0 : i32, i32
  }
  func.func @transform_2(%arg0: i32, %arg1: i32) -> (i32, i32) {
    %c0_i32 = arith.constant 0 : i32
    %c0_i32_0 = arith.constant 0 : i32
    %c0_i32_1 = arith.constant 0 : i32
    return %c0_i32, %c0_i32_0 : i32, i32
  }
  func.func @transform_3(%arg0: i32, %arg1: i32) -> (i32, i32, i32) {
    %c0_i32 = arith.constant 0 : i32
    %c0_i32_0 = arith.constant 0 : i32
    return %arg0, %arg1, %c0_i32 : i32, i32, i32
  }
}

</mosaic_0001>

<llo_original>
// kernel: tpu_custom_call.1
$region0: #{tpu_custom_call.1}
  #allocation0 [shape = 'u32[]', space=smem, size = 0x4, offset = 0x4, fixed_abs, tag = 'smem constant byte address 0x4 - core index']
  #allocation1 [shape = 'u32[144,128]{1,0:T(1,128)}', space=vmem, size = 0x12000, scoped, tag = 'internal scratch']
  %s0 = inlined_call_operand.hbm [shape: bf16[2,8,32], index: 0, kind: input, shape index: {}]
  %s1 = inlined_call_operand.hbm [shape: bf16[32,32], index: 1, kind: input, shape index: {}]
  %s2 = inlined_call_operand.vmem [shape: f32[1,32], index: 2, kind: input, shape index: {}]
  %s3 = inlined_call_operand.hbm [shape: bf16[2,8,32], index: 3, kind: output, shape index: {}]
  %s4 = sld [smem:[#allocation0]]
  $region53: #{tpu_custom_call.1} parent=0
    _
  %s6 = ssub.s32 1, %s4
  %s7 = scalar_select 0, %s6, %s4
  $region1: #{tpu_custom_call.1} parent=0
    #allocation2 [shape = 'u8[4096]{0}', space=vmem, size = 0x1000, scoped, tag = 'input window, operand 0']
    #allocation3 [shape = 's32[2]{0}', space=sflag, size = 0x8, scoped, tag = 'scoped memory for tpu_custom_call.1']
    #allocation4 [shape = 's32[2]{0}', space=sflag, size = 0x8, scoped, tag = 'scoped memory for tpu_custom_call.1']
    #allocation5 [shape = 'u8[8192]{0}', space=vmem, size = 0x2000, scoped, tag = 'input window, operand 1, single buffered']
    #allocation6 [shape = 's32[1]{0}', space=sflag, size = 0x4, scoped, tag = 'scoped memory for tpu_custom_call.1']
    #allocation7 [shape = 'u8[4096]{0}', space=vmem, size = 0x1000, scoped, tag = 'output window, operand 0']
    %8 = vsyncpa [#allocation3], 0
    %s9 = scalar_lea.sflag [#allocation3], 1
    %10 = vsyncpa %s9, 0
    %11 = vsyncpa [#allocation6], 0
    %12 = vsyncpa [#allocation4], 0
    %s13 = scalar_lea.sflag [#allocation4], 1
    %14 = vsyncpa %s13, 0
    loop: start=0, step=1, limit=4
    $region2: #{tpu_custom_call.1} parent=1 // loop_pre_header
      _
    $region3: #{tpu_custom_call.1} parent=1 // loop_header
      %s16 = sphi 0, %s20
      %p17 = scmp.ge.s32.totalorder %s16, 4
      %s23 = sphi 0, %s35
      %s24 = sphi 0, %s31
      %s25 = sphi 0, %s23
      %s26 = sphi 0, %s24
      %s27 = sphi 0, %s25
      %s28 = sphi 0, %s26
      %s40 = sphi 0, %s42
      %s43 = sphi 0, %s40
      %s44 = sphi 0, %s43
      %s60 = sphi 0, %s44
      %s64 = sphi 0, %s64
      %s66 = sphi 0, %s64
      %s67 = sphi 0, %s66
      %s81 = sphi 0, %s67
      %s85 = sphi 0, %s85
      %s87 = sphi 0, %s85
      %s88 = sphi 0, %s87
      %s102 = sphi 0, %s88
      %s110 = sphi 0, %s112
      %s113 = sphi 0, %s110
      %s114 = sphi 0, %s113
      %s130 = sphi 0, %s114
    $region4: #{tpu_custom_call.1} parent=1 // loop_header_branch
      %19 = sbr.rel (%p17) target = $region8
    $region5: #{tpu_custom_call.1} parent=1 // loop_body
      %s21 = ssub.s32 %s16, 1
      %s22 = ssub.s32 %s16, 2
      %s29 = sadd.s32 1, %s24
      %p30 = scmp.ge.s32.totalorder %s29, 1
      %s31 = scalar_select %p30, 0, %s29
      %s32 = sadd.s32 1, %s23
      %s33 = scalar_select %p30, %s32, %s23
      %p34 = scmp.ge.s32.totalorder %s33, 2
      %s35 = scalar_select %p34, 0, %s33
      %s36 = ssub.s32 %s23, %s35
      %s37 = ssub.s32 %s24, %s31
      %s38 = sor.u32 %s36, %s37
      %p39 = scmp.eq.s32.totalorder %s38, 0
      %s41 = sadd.s32 %s40, 1
      %s42 = scalar_select %p39, %s40, %s41
      %p45 = pneg %p39
      %p46 = scmp.eq.s32.totalorder %s16, 1
      %p47 = por %p45, %p46
      %p48 = scmp.ne.s32.totalorder %s40, %s43
      %p49 = scmp.eq.s32.totalorder %s16, 0
      %p50 = por %p48, %p49
      %p51 = scmp.ne.s32.totalorder %s40, %s43
      %p52 = scmp.eq.s32.totalorder %s21, 1
      %p53 = por %p51, %p52
      %p54 = scmp.ne.s32.totalorder %s43, %s44
      %p55 = scmp.eq.s32.totalorder %s21, 0
      %p56 = por %p54, %p55
      %p57 = scmp.ne.s32.totalorder %s43, %s44
      %p58 = scmp.eq.s32.totalorder %s22, 1
      %p59 = por %p57, %p58
      %p61 = scmp.ne.s32.totalorder %s44, %s60
      %p62 = scmp.eq.s32.totalorder %s22, 0
      %p63 = por %p61, %p62
      %s65 = sadd.s32 %s64, 1
      %p68 = scmp.eq.s32.totalorder %s16, 1
      %p69 = scmp.ne.s32.totalorder %s64, %s66
      %p70 = scmp.eq.s32.totalorder %s16, 0
      %p71 = por %p69, %p70
      %p72 = scmp.ne.s32.totalorder %s64, %s66
      %p73 = scmp.eq.s32.totalorder %s21, 1
      %p74 = por %p72, %p73
      %p75 = scmp.ne.s32.totalorder %s66, %s67
      %p76 = scmp.eq.s32.totalorder %s21, 0
      %p77 = por %p75, %p76
      %p78 = scmp.ne.s32.totalorder %s66, %s67
      %p79 = scmp.eq.s32.totalorder %s22, 1
      %p80 = por %p78, %p79
      %p82 = scmp.ne.s32.totalorder %s67, %s81
      %p83 = scmp.eq.s32.totalorder %s22, 0
      %p84 = por %p82, %p83
      %s86 = sadd.s32 %s85, 1
      %p89 = scmp.eq.s32.totalorder %s16, 1
      %p90 = scmp.ne.s32.totalorder %s85, %s87
      %p91 = scmp.eq.s32.totalorder %s16, 0
      %p92 = por %p90, %p91
      %p93 = scmp.ne.s32.totalorder %s85, %s87
      %p94 = scmp.eq.s32.totalorder %s21, 1
      %p95 = por %p93, %p94
      %p96 = scmp.ne.s32.totalorder %s87, %s88
      %p97 = scmp.eq.s32.totalorder %s21, 0
      %p98 = por %p96, %p97
      %p99 = scmp.ne.s32.totalorder %s87, %s88
      %p100 = scmp.eq.s32.totalorder %s22, 1
      %p101 = por %p99, %p100
      %p103 = scmp.ne.s32.totalorder %s88, %s102
      %p104 = scmp.eq.s32.totalorder %s22, 0
      %p105 = por %p103, %p104
      %s106 = ssub.s32 %s23, %s35
      %s107 = ssub.s32 %s24, %s31
      %s108 = sor.u32 %s106, %s107
      %p109 = scmp.eq.s32.totalorder %s108, 0
      %s111 = sadd.s32 %s110, 1
      %s112 = scalar_select %p109, %s110, %s111
      %p115 = pneg %p109
      %p116 = scmp.eq.s32.totalorder %s16, 1
      %p117 = por %p115, %p116
      %p118 = scmp.ne.s32.totalorder %s110, %s113
      %p119 = scmp.eq.s32.totalorder %s16, 0
      %p120 = por %p118, %p119
      %p121 = scmp.ne.s32.totalorder %s110, %s113
      %p122 = scmp.eq.s32.totalorder %s21, 1
      %p123 = por %p121, %p122
      %p124 = scmp.ne.s32.totalorder %s113, %s114
      %p125 = scmp.eq.s32.totalorder %s21, 0
      %p126 = por %p124, %p125
      %p127 = scmp.ne.s32.totalorder %s113, %s114
      %p128 = scmp.eq.s32.totalorder %s22, 1
      %p129 = por %p127, %p128
      %p131 = scmp.ne.s32.totalorder %s114, %s130
      %p132 = scmp.eq.s32.totalorder %s22, 0
      %p133 = por %p131, %p132
      %p134 = scmp.le.s32.totalorder 1, %s16
      %p135 = scmp.lt.s32.totalorder %s16, 3
      %p136 = pnand %p134, %p135
      %p137 = pneg %p136
      // Predicated region
      $region9: #{tpu_custom_call.1} parent=5 // pred_check
        _
      $region10: #{tpu_custom_call.1} parent=5 // pred_check_branch
        %139 = sbr.rel (%p136) target = $region12
      $region11: #{tpu_custom_call.1} parent=5 // pred_region
        %s140 = ssub.s32 %s16, 1
        // Predicated region
        $region13: #{tpu_custom_call.1} parent=11 // pred_check
          %p141 = pneg %p77
        $region14: #{tpu_custom_call.1} parent=11 // pred_check_branch
          %143 = sbr.rel (%p141) target = $region16
        $region15: #{tpu_custom_call.1} parent=11 // pred_region
          %s145 = ssub.s32 256, 256
          %146 = vsyncadd [#allocation6], %s145
          %s147 = sshll.u32 [#allocation5], 4
          %s148 = int_to_ptr.vmem [resolvable:$true] %s147
          %153 = dma.hbm_to_vmem [thread:$0]  %s1, 256, %s148, [#allocation6], 64, 64, 4
        $region16: #{tpu_custom_call.1} parent=11 // pred_fallthru
          _
        // Predicated region
        $region17: #{tpu_custom_call.1} parent=11 // pred_check
          %p154 = pneg %p98
        $region18: #{tpu_custom_call.1} parent=11 // pred_check_branch
          %156 = sbr.rel (%p154) target = $region20
        $region19: #{tpu_custom_call.1} parent=11 // pred_region
          _
        $region20: #{tpu_custom_call.1} parent=11 // pred_fallthru
          _
      $region12: #{tpu_custom_call.1} parent=5 // pred_fallthru
        _
      %p157 = scmp.lt.s32.totalorder %s16, 2
      // Predicated region
      $region21: #{tpu_custom_call.1} parent=5 // pred_check
        %p158 = pneg %p157
      $region22: #{tpu_custom_call.1} parent=5 // pred_check_branch
        %160 = sbr.rel (%p158) target = $region24
      $region23: #{tpu_custom_call.1} parent=5 // pred_region
        // Predicated region
        $region25: #{tpu_custom_call.1} parent=23 // pred_check
          %p161 = pneg %p50
        $region26: #{tpu_custom_call.1} parent=23 // pred_check_branch
          %163 = sbr.rel (%p161) target = $region28
        $region27: #{tpu_custom_call.1} parent=23 // pred_region
          %s164 = sand.u32 %s40, 1
          %s165 = scalar_lea.sflag [#allocation3], %s164
          %s166 = sand.u32 %s40, 1
          %s167 = smul.addr %s166, 4
          %s168 = scalar_lea.vmem [#allocation2], %s167
          %s170 = ssub.s32 64, 64
          %171 = vsyncadd %s165, %s170
          %s172 = sadd.s32 %s24, %s23
          %s173 = smul.addr %s172, 64
          %s174 = scalar_lea.hbm %s0, %s173
          %s176 = sshll.u32 %s168, 4
          %s177 = int_to_ptr.vmem [resolvable:$true] %s176
          %179 = dma.hbm_to_vmem [thread:$0]  %s174, 64, %s177, %s165
        $region28: #{tpu_custom_call.1} parent=23 // pred_fallthru
          _
      $region24: #{tpu_custom_call.1} parent=5 // pred_fallthru
        _
      %p180 = scmp.le.s32.totalorder 1, %s16
      %p181 = scmp.lt.s32.totalorder %s16, 3
      %p182 = pnand %p180, %p181
      %p183 = pneg %p182
      // Predicated region
      $region29: #{tpu_custom_call.1} parent=5 // pred_check
        _
      $region30: #{tpu_custom_call.1} parent=5 // pred_check_branch
        %185 = sbr.rel (%p182) target = $region32
      $region31: #{tpu_custom_call.1} parent=5 // pred_region
        %s186 = ssub.s32 %s16, 1
        %s187 = sand.u32 %s43, 1
        %s188 = scalar_lea.sflag [#allocation3], %s187
        %s189 = sand.u32 %s43, 1
        %s190 = smul.addr %s189, 4
        %s191 = scalar_lea.vmem [#allocation2], %s190
        // Predicated region
        $region33: #{tpu_custom_call.1} parent=31 // pred_check
          %p192 = pneg %p56
        $region34: #{tpu_custom_call.1} parent=31 // pred_check_branch
          %194 = sbr.rel (%p192) target = $region36
        $region35: #{tpu_custom_call.1} parent=31 // pred_region
          %195 = dma.done %s188, 64
        $region36: #{tpu_custom_call.1} parent=31 // pred_fallthru
          _
        // Predicated region
        $region37: #{tpu_custom_call.1} parent=31 // pred_check
          %p196 = pneg %p77
        $region38: #{tpu_custom_call.1} parent=31 // pred_check_branch
          %198 = sbr.rel (%p196) target = $region40
        $region39: #{tpu_custom_call.1} parent=31 // pred_region
          %199 = dma.done [#allocation6], 256
        $region40: #{tpu_custom_call.1} parent=31 // pred_fallthru
          _
        %s200 = sand.u32 %s43, 1
        %s201 = scalar_lea.sflag [#allocation3], %s200
        %s202 = sand.u32 %s43, 1
        %s203 = smul.addr %s202, 4
        %s204 = scalar_lea.vmem [#allocation2], %s203
        %p205 = pneg %p56
        %p206 = pneg %p53
        %p207 = pneg %p77
        %p208 = pneg %p74
        %p209 = pneg %p98
        %p210 = pneg %p95
        %p211 = pneg %p126
        %p212 = pneg %p123
        %s213 = sand.u32 %s113, 1
        %s214 = scalar_lea.sflag [#allocation4], %s213
        %s215 = sand.u32 %s113, 1
        %s216 = smul.addr %s215, 4
        %s217 = scalar_lea.vmem [#allocation7], %s216
        %v219 = vld [vmem:[%s191] sm:$0xf]
        %v220 = vld [vmem:[#allocation5] sm:$0xf]
        %v221 = vld [vmem:[#allocation5 + $0x4] sm:$0xf]
        %v222 = vld [vmem:[#allocation5 + $0x8] sm:$0xf]
        %v223 = vld [vmem:[#allocation5 + $0xc] sm:$0xf]
        %v224 = vld [vmem:[%s2] sm:$0x1]
        %v226 = vlaneseq
        %v227 = vshrl.u32 %v226, 7
        %v228 = vsub.s32 0, %v227
        %v229 = vrot.slane %v224, %v228
        %v235 = vunpack.c.l.b16 %v220
        %v236 = vunpack.c.l.b16 %v221
        %v237 = vunpack.c.l.b16 %v222
        %v238 = vunpack.c.l.b16 %v223
        %v239 = vpack.c.b16 %v236, %v235
        %v240 = vpack.c.b16 %v238, %v237
        %vm243 = vcmask 261120
        %v245 = vsel %vm243, %v219, 0
        %247 = vmatprep.subr.bf16.mxu0 0
        %248 = vmatpush1.bf16.msra.mxu0 0
        %249 = vmatprep.subr.bf16.mxu0 0
        %250 = vmatpush1.bf16.msra.mxu0 0
        %251 = vmatprep.subr.bf16.mxu0 0
        %252 = vmatpush1.bf16.msra.mxu0 0
        %253 = vmatprep.subr.bf16.mxu0 0
        %254 = vmatpush1.bf16.msra.mxu0 0
        %255 = vmatprep.subr.bf16.mxu0 0
        %256 = vmatpush1.bf16.msra.mxu0 0
        %257 = vmatprep.subr.bf16.mxu0 0
        %258 = vmatpush1.bf16.msra.mxu0 0
        %259 = vmatprep.subr.bf16.mxu0 0
        %260 = vmatpush1.bf16.msra.mxu0 %v240
        %261 = vmatprep.subr.bf16.mxu0 0
        %262 = vmatpush1.bf16.msra.mxu0 %v239
        %263 = vmatprep.subr.bf16.mxu0 0
        %264 = vmatpush2.bf16.msra.mxu0 0
        %265 = vmatprep.subr.bf16.mxu0 0
        %266 = vmatpush2.bf16.msra.mxu0 0
        %267 = vmatprep.subr.bf16.mxu0 0
        %268 = vmatpush2.bf16.msra.mxu0 0
        %269 = vmatprep.subr.bf16.mxu0 0
        %270 = vmatpush2.bf16.msra.mxu0 0
        %271 = vmatprep.subr.bf16.mxu0 0
        %272 = vmatpush2.bf16.msra.mxu0 0
        %273 = vmatprep.subr.bf16.mxu0 0
        %274 = vmatpush2.bf16.msra.mxu0 0
        %275 = vmatprep.subr.bf16.mxu0 0
        %276 = vmatpush2.bf16.msra.mxu0 0
        %277 = vmatprep.subr.bf16.mxu0 0
        %278 = vmatpush2.bf16.msra.mxu0 0
        %279 = vmatprep.mubr.bf16.mxu0 0
        %280 = vmatmul.mubr.bf16.gmra.mxu0 %v245
        %v281 = vpop.f32.mrf.mxu0
        %v282 = vadd.f32 %v229, %v281
        %v283 = vpop.f32.mrf.mxu0
        %v284 = vpop.f32.mrf.mxu0
        %v285 = vpop.f32.mrf.mxu0
        %286 = vdwg.mxu0
        %v287 = vpack.c.bf16 %v282, %v282
        %vm288 = vcmask 257024
        %289 = vst.msk [vmem:[%s217] sm:$0xf] %vm288, %v287
        %s290 = sand.u32 %s113, 1
        %s291 = scalar_lea.sflag [#allocation4], %s290
        %s292 = sand.u32 %s113, 1
        %s293 = smul.addr %s292, 4
        %s294 = scalar_lea.vmem [#allocation7], %s293
        // Predicated region
        $region41: #{tpu_custom_call.1} parent=31 // pred_check
          %p295 = pneg %p123
        $region42: #{tpu_custom_call.1} parent=31 // pred_check_branch
          %297 = sbr.rel (%p295) target = $region44
        $region43: #{tpu_custom_call.1} parent=31 // pred_region
          %s299 = ssub.s32 64, 64
          %300 = vsyncadd %s291, %s299
          %s301 = sadd.s32 %s26, %s25
          %s302 = smul.addr %s301, 64
          %s303 = scalar_lea.hbm %s3, %s302
          %s305 = sshll.u32 %s294, 4
          %s306 = int_to_ptr.vmem [resolvable:$true] %s305
          %308 = dma.vmem_to_hbm [thread:$0]  %s306, 64, %s303, %s291
        $region44: #{tpu_custom_call.1} parent=31 // pred_fallthru
          _
      $region32: #{tpu_custom_call.1} parent=5 // pred_fallthru
        _
      %p309 = scmp.le.s32.totalorder 2, %s16
      // Predicated region
      $region45: #{tpu_custom_call.1} parent=5 // pred_check
        %p310 = pneg %p309
      $region46: #{tpu_custom_call.1} parent=5 // pred_check_branch
        %312 = sbr.rel (%p310) target = $region48
      $region47: #{tpu_custom_call.1} parent=5 // pred_region
        %s313 = ssub.s32 %s16, 2
        // Predicated region
        $region49: #{tpu_custom_call.1} parent=47 // pred_check
          %p314 = pneg %p129
        $region50: #{tpu_custom_call.1} parent=47 // pred_check_branch
          %316 = sbr.rel (%p314) target = $region52
        $region51: #{tpu_custom_call.1} parent=47 // pred_region
          %s317 = sand.u32 %s114, 1
          %s318 = scalar_lea.sflag [#allocation4], %s317
          %s319 = sand.u32 %s114, 1
          %s320 = smul.addr %s319, 4
          %s321 = scalar_lea.vmem [#allocation7], %s320
          %322 = dma.done %s318, 64
        $region52: #{tpu_custom_call.1} parent=47 // pred_fallthru
          _
      $region48: #{tpu_custom_call.1} parent=5 // pred_fallthru
        _
    $region6: #{tpu_custom_call.1} parent=1 // loop_footer
      %s20 = sadd.s32 1, %s16
    $region7: #{tpu_custom_call.1} parent=1 // loop_footer_branch
      %15 = sbr.rel target = $region3
    $region8: #{tpu_custom_call.1} parent=1 // loop_exit
      _
    %323 = vsyncpa [#allocation3], 1
    %s324 = scalar_lea.sflag [#allocation3], 1
    %325 = vsyncpa %s324, 1
    %326 = vsyncpa [#allocation6], 1
    %327 = vsyncpa [#allocation4], 1
    %s328 = scalar_lea.sflag [#allocation4], 1
    %329 = vsyncpa %s328, 1

</llo_original>
